<compile_context>
chip_gen: v6e
topology: v6e:2x2x1
jax: 0.10.0
libtpu: 0.0.40
codegen_flags: <defaults>
</compile_context>

<pallas_src>
import functools
import math

import jax
import jax.numpy as jnp
from jax.experimental import pallas as pl
from jax.experimental.pallas import tpu as pltpu


# ---------------------------------------------------------------------------
# Stage 1: fused QKV projection -> per-head (B, H, T, hd) bf16 tensors.
# Runs once per token tile; the head-split relayout happens here (once), never
# inside the attention kernel's (q-tile x kv-tile) hot loop.
# ---------------------------------------------------------------------------
def _qkv_proj_kernel(x_ref, w_ref, q_ref, k_ref, v_ref, *, num_heads, head_dim):
    # x_ref : (1, tt, d_in)        bf16
    # w_ref : (d_in, 3*d_out)      bf16   (Wq columns pre-scaled by 1/sqrt(hd))
    # q/k/v_ref : (1, H, tt, hd)   bf16
    d_out = num_heads * head_dim
    x = x_ref[0]                                                        # (tt, d_in)
    tt = x.shape[0]

    qkv = jnp.dot(x, w_ref[...], preferred_element_type=jnp.float32)   # (tt, 3*d_out) f32
    qkv = qkv.astype(jnp.bfloat16)                                      # cast once

    def heads(a):  # (tt, d_out) -> (H, tt, hd)
        return jnp.transpose(a.reshape(tt, num_heads, head_dim), (1, 0, 2))

    q_ref[0] = heads(qkv[:, :d_out])
    k_ref[0] = heads(qkv[:, d_out:2 * d_out])
    v_ref[0] = heads(qkv[:, 2 * d_out:])


# ---------------------------------------------------------------------------
# Stage 2: causal flash attention over KV tiles + fused output projection.
# grid = (B, nq, nkv), kv innermost and "arbitrary"; m/l/acc in f32 scratch.
# ---------------------------------------------------------------------------
def _flash_attn_kernel(q_ref, k_ref, v_ref, wo_ref, bo_ref, o_ref,
                       m_scr, l_scr, acc_scr):
    # q_ref : (1, H, tq, hd)  bf16      k_ref/v_ref : (1, H, tkv, hd) bf16
    # wo_ref: (d_out, d_out)  bf16      bo_ref      : (1, d_out)      f32
    # o_ref : (1, tq, d_out)            scratch     : f32
    _, H, tq, hd = q_ref.shape
    tkv = k_ref.shape[2]
    d_out = H * hd

    qi = pl.program_id(1)
    kvi = pl.program_id(2)
    nkv = pl.num_programs(2)

    q_start = qi * tq
    kv_start = kvi * tkv
    NEG = jnp.float32(-1e30)   # finite mask fill: NaN-safe with block skipping

    @pl.when(kvi == 0)
    def _init():
        m_scr[...] = jnp.full_like(m_scr, NEG)
        l_scr[...] = jnp.zeros_like(l_scr)
        acc_scr[...] = jnp.zeros_like(acc_scr)

    # Causal block skipping: fully-masked KV tiles do no work at all.
    @pl.when(kv_start <= q_start + (tq - 1))
    def _update():
        q = q_ref[0]                       # (H, tq, hd)
        k = k_ref[0]                       # (H, tkv, hd)
        v = v_ref[0]                       # (H, tkv, hd)

        # Scores: batched over heads, contraction on the last dim of both
        # operands (no K^T materialization), f32 accumulation.
        s = jnp.einsum('hqd,hkd->hqk', q, k,
                       preferred_element_type=jnp.float32)              # (H, tq, tkv)

        row = q_start + jax.lax.broadcasted_iota(jnp.int32, (tq, tkv), 0)
        col = kv_start + jax.lax.broadcasted_iota(jnp.int32, (tq, tkv), 1)
        s = jnp.where((col > row)[None, :, :], NEG, s)

        # Online softmax update (all stats in f32).
        m_prev = m_scr[...]                                              # (H, tq, 1)
        m_new = jnp.maximum(m_prev, jnp.max(s, axis=-1, keepdims=True))
        alpha = jnp.exp(m_prev - m_new)                                  # (H, tq, 1)
        p = jnp.exp(s - m_new)                                           # (H, tq, tkv)

        l_scr[...] = alpha * l_scr[...] + jnp.sum(p, axis=-1, keepdims=True)
        acc_scr[...] = alpha * acc_scr[...] + jnp.einsum(
            'hqk,hkd->hqd', p.astype(jnp.bfloat16), v,
            preferred_element_type=jnp.float32)                          # (H, tq, hd)
        m_scr[...] = m_new

    @pl.when(kvi == nkv - 1)
    def _finalize():
        inv_l = pl.reciprocal(l_scr[...], approx=True)                   # EUP slot
        ctx = acc_scr[...] * inv_l                                       # (H, tq, hd)
        # Merge heads once per q tile, then a single fused output projection.
        ctx = jnp.transpose(ctx, (1, 0, 2)).reshape(tq, d_out).astype(jnp.bfloat16)
        out = jnp.dot(ctx, wo_ref[...],
                      preferred_element_type=jnp.float32) + bo_ref[...]  # (tq, d_out)
        o_ref[0] = out.astype(o_ref.dtype)


def _pick_tiles(T):
    """(tq, tkv): query / key-value tile sizes along the sequence axis."""
    if T % 128 != 0:
        return T, T                      # small / unaligned sequences: one tile
    tq = 128                             # safe default (v7x: 64 MiB VMEM)
    try:
        # v5e/v6e (128 MiB VMEM) can afford a larger query tile.
        if T % 256 == 0 and pltpu.get_tpu_info().vmem_capacity_bytes >= (96 << 20):
            tq = 256
    except Exception:
        pass
    tkv = 512 if T % 512 == 0 else 128
    return tq, tkv


def multi_head_attention(x, wq_t, wk_t, wv_t, wo_t, bo, *, num_heads):
    """x: (B, T, d_in). wq_t/wk_t/wv_t: (d_in, d_out). wo_t: (d_out, d_out). bo: (d_out,)."""
    B, T, d_in = x.shape
    d_out = wq_t.shape[1]
    head_dim = d_out // num_heads
    assert head_dim * num_heads == d_out
    out_dtype = x.dtype

    tq, tkv = _pick_tiles(T)
    nq, nkv = T // tq, T // tkv

    # bf16 MXU operands, cast once wrapper-side; scale folded into Wq columns.
    scale = 1.0 / math.sqrt(head_dim)
    x_b = x.astype(jnp.bfloat16)
    w_qkv = jnp.concatenate([wq_t * scale, wk_t, wv_t], axis=1).astype(jnp.bfloat16)
    wo_b = wo_t.astype(jnp.bfloat16)
    bo2 = bo.reshape(1, d_out).astype(jnp.float32)

    # ---- Stage 1: QKV projection (once per token, never per query tile). ----
    head_shape = jax.ShapeDtypeStruct((B, num_heads, T, head_dim), jnp.bfloat16)
    q_h, k_h, v_h = pl.pallas_call(
        functools.partial(_qkv_proj_kernel, num_heads=num_heads, head_dim=head_dim),
        out_shape=(head_shape, head_shape, head_shape),
        grid_spec=pltpu.PrefetchScalarGridSpec(
            num_scalar_prefetch=0,
            grid=(B, nq),
            in_specs=[
                pl.BlockSpec((1, tq, d_in), lambda b, t: (b, t, 0)),       # x (bf16)
                pl.BlockSpec((d_in, 3 * d_out), lambda b, t: (0, 0)),      # fused Wqkv
            ],
            out_specs=[
                pl.BlockSpec((1, num_heads, tq, head_dim),
                             lambda b, t: (b, 0, t, 0)),
            ] * 3,
        ),
        compiler_params=pltpu.CompilerParams(
            dimension_semantics=("parallel", "parallel")),
    )(x_b, w_qkv)

    # ---- Stage 2: flash attention over KV tiles + fused output projection. ----
    def kv_index_map(b, qi, kvi):
        # Clamp to the last causally-needed KV block: skipped (fully masked)
        # blocks revisit an already-resident block, so no DMA is issued.
        last_needed = (qi * tq + tq - 1) // tkv
        return (b, 0, jnp.minimum(kvi, last_needed), 0)

    out = pl.pallas_call(
        _flash_attn_kernel,
        out_shape=jax.ShapeDtypeStruct((B, T, d_out), out_dtype),
        grid_spec=pltpu.PrefetchScalarGridSpec(
            num_scalar_prefetch=0,
            grid=(B, nq, nkv),
            in_specs=[
                pl.BlockSpec((1, num_heads, tq, head_dim),
                             lambda b, qi, kvi: (b, 0, qi, 0)),            # Q tile
                pl.BlockSpec((1, num_heads, tkv, head_dim), kv_index_map),  # K tile
                pl.BlockSpec((1, num_heads, tkv, head_dim), kv_index_map),  # V tile
                pl.BlockSpec((d_out, d_out), lambda b, qi, kvi: (0, 0)),    # Wo
                pl.BlockSpec((1, d_out), lambda b, qi, kvi: (0, 0)),        # out bias
            ],
            out_specs=pl.BlockSpec((1, tq, d_out), lambda b, qi, kvi: (b, qi, 0)),
            scratch_shapes=[
                pltpu.VMEM((num_heads, tq, 1), jnp.float32),         # running max
                pltpu.VMEM((num_heads, tq, 1), jnp.float32),         # running denom
                pltpu.VMEM((num_heads, tq, head_dim), jnp.float32),  # running context
            ],
        ),
        compiler_params=pltpu.CompilerParams(
            dimension_semantics=("parallel", "parallel", "arbitrary")),
    )(q_h, k_h, v_h, wo_b, bo2)
    return out


def _reference(x, wq_t, wk_t, wv_t, wo_t, bo, num_heads):
    """Pure-JAX f32 reference mirroring the PyTorch forward (eval mode)."""
    B, T, d_in = x.shape
    d_out = wq_t.shape[1]
    hd = d_out // num_heads
    q = (x @ wq_t).reshape(B, T, num_heads, hd).transpose(0, 2, 1, 3)
    k = (x @ wk_t).reshape(B, T, num_heads, hd).transpose(0, 2, 1, 3)
    v = (x @ wv_t).reshape(B, T, num_heads, hd).transpose(0, 2, 1, 3)
    s = jnp.einsum("bhqd,bhkd->bhqk", q, k)
    mask = jnp.triu(jnp.ones((T, T), bool), k=1)
    s = jnp.where(mask, -jnp.inf, s)
    w = jax.nn.softmax(s / math.sqrt(hd), axis=-1)
    ctx = jnp.einsum("bhqk,bhkd->bhqd", w, v).transpose(0, 2, 1, 3).reshape(B, T, d_out)
    return ctx @ wo_t + bo


if __name__ == "__main__":
    # Small shapes consistent with the module.
    B, T, d_in, d_out, num_heads = 2, 8, 32, 32, 4

    key = jax.random.PRNGKey(0)
    kx, kq, kk, kv, ko, kb = jax.random.split(key, 6)

    x = jax.random.normal(kx, (B, T, d_in), dtype=jnp.float32)

    # Linear weights are (out, in) in torch; we store them pre-transposed (in, out).
    sc_in = 1.0 / math.sqrt(d_in)
    sc_out = 1.0 / math.sqrt(d_out)
    wq_t = jax.random.uniform(kq, (d_in, d_out), jnp.float32, -sc_in, sc_in)
    wk_t = jax.random.uniform(kk, (d_in, d_out), jnp.float32, -sc_in, sc_in)
    wv_t = jax.random.uniform(kv, (d_in, d_out), jnp.float32, -sc_in, sc_in)
    wo_t = jax.random.uniform(ko, (d_out, d_out), jnp.float32, -sc_out, sc_out)
    bo = jax.random.uniform(kb, (d_out,), jnp.float32, -sc_out, sc_out)

    out = multi_head_attention(x, wq_t, wk_t, wv_t, wo_t, bo, num_heads=num_heads)
    out = jax.block_until_ready(out)

    ref = _reference(x, wq_t, wk_t, wv_t, wo_t, bo, num_heads)
    assert out.shape == (B, T, d_out)
    # bf16 MXU operands + approx reciprocal -> looser tolerance than f32 reference.
    assert jnp.allclose(out, ref, atol=5e-2, rtol=5e-2), "mismatch vs reference"

    print("KERNEL_OK")
</pallas_src>

<mosaic_0001>
module attributes {stable_mosaic.version = 11 : i64} {
  func.func @_qkv_proj_kernel(%arg0: i32, %arg1: i32, %arg2: memref<1x8x32xbf16, #tpu.memory_space<vmem>>, %arg3: memref<32x96xbf16, #tpu.memory_space<vmem>>, %arg4: memref<1x4x8x8xbf16, #tpu.memory_space<vmem>>, %arg5: memref<1x4x8x8xbf16, #tpu.memory_space<vmem>>, %arg6: memref<1x4x8x8xbf16, #tpu.memory_space<vmem>>) attributes {dimension_semantics = [#tpu.dimension_semantics<parallel>, #tpu.dimension_semantics<parallel>], iteration_bounds = array<i64: 2, 1>, scalar_prefetch = 0 : i64, scratch_operands = 0 : i64, tpu.core_type = #tpu.core_type<tc>, window_params = [{transform_indices = @transform_0, window_bounds = array<i64: 1, 8, 32>}, {pipeline_mode = #tpu.pipeline_mode<synchronous>, transform_indices = @transform_1, window_bounds = array<i64: 32, 96>}, {transform_indices = @transform_2, window_bounds = array<i64: 1, 4, 8, 8>}, {transform_indices = @transform_3, window_bounds = array<i64: 1, 4, 8, 8>}, {transform_indices = @transform_4, window_bounds = array<i64: 1, 4, 8, 8>}]} {
    %c0 = arith.constant 0 : index
    %c0_0 = arith.constant 0 : index
    %c0_1 = arith.constant 0 : index
    %0 = vector.load %arg2[%c0, %c0_0, %c0_1] : memref<1x8x32xbf16, #tpu.memory_space<vmem>>, vector<1x8x32xbf16>
    %1 = vector.shape_cast %0 : vector<1x8x32xbf16> to vector<8x32xbf16>
    %c0_2 = arith.constant 0 : index
    %c0_3 = arith.constant 0 : index
    %2 = vector.load %arg3[%c0_2, %c0_3] : memref<32x96xbf16, #tpu.memory_space<vmem>>, vector<32x96xbf16>
    %cst = arith.constant dense<0.000000e+00> : vector<8x96xf32>
    %3 = tpu.matmul %1, %2, %cst {dimension_numbers = #tpu.dot_dimension_numbers<[1], [0], [0], [1], [0, 0, 1, 1], [], []>} : vector<8x32xbf16>, vector<32x96xbf16>, vector<8x96xf32> -> vector<8x96xf32>
    %4 = arith.truncf %3 : vector<8x96xf32> to vector<8x96xbf16>
    %5 = vector.extract_strided_slice %4 {offsets = [0, 0], sizes = [8, 32], strides = [1, 1]} : vector<8x96xbf16> to vector<8x32xbf16>
    %6 = vector.shape_cast %5 : vector<8x32xbf16> to vector<8x4x8xbf16>
    %7 = tpu.transpose %6, [1, 0, 2] : vector<8x4x8xbf16> -> vector<4x8x8xbf16>
    %c0_4 = arith.constant 0 : index
    %c0_5 = arith.constant 0 : index
    %c0_6 = arith.constant 0 : index
    %c0_7 = arith.constant 0 : index
    %8 = vector.load %arg4[%c0_4, %c0_5, %c0_6, %c0_7] : memref<1x4x8x8xbf16, #tpu.memory_space<vmem>>, vector<1x4x8x8xbf16>
    %9 = vector.shape_cast %8 : vector<1x4x8x8xbf16> to vector<4x8x8xbf16>
    %10 = vector.shape_cast %7 : vector<4x8x8xbf16> to vector<1x4x8x8xbf16>
    tpu.vector_store %arg4[%c0_4, %c0_5, %c0_6, %c0_7], %10 {strides = array<i32>} : memref<1x4x8x8xbf16, #tpu.memory_space<vmem>>, vector<1x4x8x8xbf16>,
    %11 = vector.extract_strided_slice %4 {offsets = [0, 32], sizes = [8, 32], strides = [1, 1]} : vector<8x96xbf16> to vector<8x32xbf16>
    %12 = vector.shape_cast %11 : vector<8x32xbf16> to vector<8x4x8xbf16>
    %13 = tpu.transpose %12, [1, 0, 2] : vector<8x4x8xbf16> -> vector<4x8x8xbf16>
    %c0_8 = arith.constant 0 : index
    %c0_9 = arith.constant 0 : index
    %c0_10 = arith.constant 0 : index
    %c0_11 = arith.constant 0 : index
    %14 = vector.load %arg5[%c0_8, %c0_9, %c0_10, %c0_11] : memref<1x4x8x8xbf16, #tpu.memory_space<vmem>>, vector<1x4x8x8xbf16>
    %15 = vector.shape_cast %14 : vector<1x4x8x8xbf16> to vector<4x8x8xbf16>
    %16 = vector.shape_cast %13 : vector<4x8x8xbf16> to vector<1x4x8x8xbf16>
    tpu.vector_store %arg5[%c0_8, %c0_9, %c0_10, %c0_11], %16 {strides = array<i32>} : memref<1x4x8x8xbf16, #tpu.memory_space<vmem>>, vector<1x4x8x8xbf16>,
    %17 = vector.extract_strided_slice %4 {offsets = [0, 64], sizes = [8, 32], strides = [1, 1]} : vector<8x96xbf16> to vector<8x32xbf16>
    %18 = vector.shape_cast %17 : vector<8x32xbf16> to vector<8x4x8xbf16>
    %19 = tpu.transpose %18, [1, 0, 2] : vector<8x4x8xbf16> -> vector<4x8x8xbf16>
    %c0_12 = arith.constant 0 : index
    %c0_13 = arith.constant 0 : index
    %c0_14 = arith.constant 0 : index
    %c0_15 = arith.constant 0 : index
    %20 = vector.load %arg6[%c0_12, %c0_13, %c0_14, %c0_15] : memref<1x4x8x8xbf16, #tpu.memory_space<vmem>>, vector<1x4x8x8xbf16>
    %21 = vector.shape_cast %20 : vector<1x4x8x8xbf16> to vector<4x8x8xbf16>
    %22 = vector.shape_cast %19 : vector<4x8x8xbf16> to vector<1x4x8x8xbf16>
    tpu.vector_store %arg6[%c0_12, %c0_13, %c0_14, %c0_15], %22 {strides = array<i32>} : memref<1x4x8x8xbf16, #tpu.memory_space<vmem>>, vector<1x4x8x8xbf16>,
    return
  }
  func.func @transform_0(%arg0: i32, %arg1: i32) -> (i32, i32, i32) {
    %c0_i32 = arith.constant 0 : i32
    %c0_i32_0 = arith.constant 0 : i32
    return %arg0, %arg1, %c0_i32 : i32, i32, i32
  }
  func.func @transform_1(%arg0: i32, %arg1: i32) -> (i32, i32) {
    %c0_i32 = arith.constant 0 : i32
    %c0_i32_0 = arith.constant 0 : i32
    %c0_i32_1 = arith.constant 0 : i32
    return %c0_i32, %c0_i32_0 : i32, i32
  }
  func.func @transform_2(%arg0: i32, %arg1: i32) -> (i32, i32, i32, i32) {
    %c0_i32 = arith.constant 0 : i32
    %c0_i32_0 = arith.constant 0 : i32
    %c0_i32_1 = arith.constant 0 : i32
    return %arg0, %c0_i32, %arg1, %c0_i32_0 : i32, i32, i32, i32
  }
  func.func @transform_3(%arg0: i32, %arg1: i32) -> (i32, i32, i32, i32) {
    %c0_i32 = arith.constant 0 : i32
    %c0_i32_0 = arith.constant 0 : i32
    %c0_i32_1 = arith.constant 0 : i32
    return %arg0, %c0_i32, %arg1, %c0_i32_0 : i32, i32, i32, i32
  }
  func.func @transform_4(%arg0: i32, %arg1: i32) -> (i32, i32, i32, i32) {
    %c0_i32 = arith.constant 0 : i32
    %c0_i32_0 = arith.constant 0 : i32
    %c0_i32_1 = arith.constant 0 : i32
    return %arg0, %c0_i32, %arg1, %c0_i32_0 : i32, i32, i32, i32
  }
}

</mosaic_0001>

<llo_original>
// kernel: tpu_custom_call.1
$region0: #{tpu_custom_call.1}
  #allocation0 [shape = 'u32[]', space=smem, size = 0x4, offset = 0x4, fixed_abs, tag = 'smem constant byte address 0x4 - core index']
  #allocation1 [shape = 'u32[144,128]{1,0:T(1,128)}', space=vmem, size = 0x12000, scoped, tag = 'internal scratch']
  %s0 = inlined_call_operand.hbm [shape: bf16[2,8,32], index: 0, kind: input, shape index: {}]
  %s1 = inlined_call_operand.hbm [shape: bf16[32,96], index: 1, kind: input, shape index: {}]
  %s2 = inlined_call_operand.hbm [shape: bf16[2,4,8,8], index: 2, kind: output, shape index: {0}]
  %s3 = inlined_call_operand.hbm [shape: bf16[2,4,8,8], index: 3, kind: output, shape index: {1}]
  %s4 = inlined_call_operand.hbm [shape: bf16[2,4,8,8], index: 4, kind: output, shape index: {2}]
  %5 = xla_tuple %s2, %s3, %s4
  %s6 = sld [smem:[#allocation0]]
  $region65: #{tpu_custom_call.1} parent=0
    _
  %s8 = ssub.s32 1, %s6
  %s9 = scalar_select 0, %s8, %s6
  $region1: #{tpu_custom_call.1} parent=0
    #allocation2 [shape = 'u8[4096]{0}', space=vmem, size = 0x1000, scoped, tag = 'input window, operand 0']
    #allocation3 [shape = 's32[2]{0}', space=sflag, size = 0x8, scoped, tag = 'scoped memory for tpu_custom_call.1']
    #allocation4 [shape = 's32[2]{0}', space=sflag, size = 0x8, scoped, tag = 'scoped memory for tpu_custom_call.1']
    #allocation5 [shape = 'u8[8192]{0}', space=vmem, size = 0x2000, scoped, tag = 'input window, operand 1, single buffered']
    #allocation6 [shape = 's32[1]{0}', space=sflag, size = 0x4, scoped, tag = 'scoped memory for tpu_custom_call.1']
    #allocation7 [shape = 'u8[16384]{0}', space=vmem, size = 0x4000, scoped, tag = 'output window, operand 0']
    #allocation8 [shape = 'u8[16384]{0}', space=vmem, size = 0x4000, scoped, tag = 'output window, operand 1']
    #allocation9 [shape = 's32[2]{0}', space=sflag, size = 0x8, scoped, tag = 'scoped memory for tpu_custom_call.1']
    #allocation10 [shape = 'u8[16384]{0}', space=vmem, size = 0x4000, scoped, tag = 'output window, operand 2']
    %10 = vsyncpa [#allocation3], 0
    %s11 = scalar_lea.sflag [#allocation3], 1
    %12 = vsyncpa %s11, 0
    %13 = vsyncpa [#allocation6], 0
    %14 = vsyncpa [#allocation4], 0
    %s15 = scalar_lea.sflag [#allocation4], 1
    %16 = vsyncpa %s15, 0
    %17 = vsyncpa [#allocation9], 0
    %s18 = scalar_lea.sflag [#allocation9], 1
    %19 = vsyncpa %s18, 0
    loop: start=0, step=1, limit=4
    $region2: #{tpu_custom_call.1} parent=1 // loop_pre_header
      _
    $region3: #{tpu_custom_call.1} parent=1 // loop_header
      %s21 = sphi 0, %s25
      %p22 = scmp.ge.s32.totalorder %s21, 4
      %s28 = sphi 0, %s40
      %s29 = sphi 0, %s36
      %s30 = sphi 0, %s28
      %s31 = sphi 0, %s29
      %s32 = sphi 0, %s30
      %s33 = sphi 0, %s31
      %s45 = sphi 0, %s47
      %s48 = sphi 0, %s45
      %s49 = sphi 0, %s48
      %s65 = sphi 0, %s49
      %s69 = sphi 0, %s69
      %s71 = sphi 0, %s69
      %s72 = sphi 0, %s71
      %s86 = sphi 0, %s72
      %s94 = sphi 0, %s96
      %s97 = sphi 0, %s94
      %s98 = sphi 0, %s97
      %s114 = sphi 0, %s98
      %s122 = sphi 0, %s124
      %s125 = sphi 0, %s122
      %s126 = sphi 0, %s125
      %s142 = sphi 0, %s126
      %s150 = sphi 0, %s152
      %s153 = sphi 0, %s150
      %s154 = sphi 0, %s153
      %s170 = sphi 0, %s154
    $region4: #{tpu_custom_call.1} parent=1 // loop_header_branch
      %24 = sbr.rel (%p22) target = $region8
    $region5: #{tpu_custom_call.1} parent=1 // loop_body
      %s26 = ssub.s32 %s21, 1
      %s27 = ssub.s32 %s21, 2
      %s34 = sadd.s32 1, %s29
      %p35 = scmp.ge.s32.totalorder %s34, 1
      %s36 = scalar_select %p35, 0, %s34
      %s37 = sadd.s32 1, %s28
      %s38 = scalar_select %p35, %s37, %s28
      %p39 = scmp.ge.s32.totalorder %s38, 2
      %s40 = scalar_select %p39, 0, %s38
      %s41 = ssub.s32 %s28, %s40
      %s42 = ssub.s32 %s29, %s36
      %s43 = sor.u32 %s41, %s42
      %p44 = scmp.eq.s32.totalorder %s43, 0
      %s46 = sadd.s32 %s45, 1
      %s47 = scalar_select %p44, %s45, %s46
      %p50 = pneg %p44
      %p51 = scmp.eq.s32.totalorder %s21, 1
      %p52 = por %p50, %p51
      %p53 = scmp.ne.s32.totalorder %s45, %s48
      %p54 = scmp.eq.s32.totalorder %s21, 0
      %p55 = por %p53, %p54
      %p56 = scmp.ne.s32.totalorder %s45, %s48
      %p57 = scmp.eq.s32.totalorder %s26, 1
      %p58 = por %p56, %p57
      %p59 = scmp.ne.s32.totalorder %s48, %s49
      %p60 = scmp.eq.s32.totalorder %s26, 0
      %p61 = por %p59, %p60
      %p62 = scmp.ne.s32.totalorder %s48, %s49
      %p63 = scmp.eq.s32.totalorder %s27, 1
      %p64 = por %p62, %p63
      %p66 = scmp.ne.s32.totalorder %s49, %s65
      %p67 = scmp.eq.s32.totalorder %s27, 0
      %p68 = por %p66, %p67
      %s70 = sadd.s32 %s69, 1
      %p73 = scmp.eq.s32.totalorder %s21, 1
      %p74 = scmp.ne.s32.totalorder %s69, %s71
      %p75 = scmp.eq.s32.totalorder %s21, 0
      %p76 = por %p74, %p75
      %p77 = scmp.ne.s32.totalorder %s69, %s71
      %p78 = scmp.eq.s32.totalorder %s26, 1
      %p79 = por %p77, %p78
      %p80 = scmp.ne.s32.totalorder %s71, %s72
      %p81 = scmp.eq.s32.totalorder %s26, 0
      %p82 = por %p80, %p81
      %p83 = scmp.ne.s32.totalorder %s71, %s72
      %p84 = scmp.eq.s32.totalorder %s27, 1
      %p85 = por %p83, %p84
      %p87 = scmp.ne.s32.totalorder %s72, %s86
      %p88 = scmp.eq.s32.totalorder %s27, 0
      %p89 = por %p87, %p88
      %s90 = ssub.s32 %s28, %s40
      %s91 = ssub.s32 %s29, %s36
      %s92 = sor.u32 %s90, %s91
      %p93 = scmp.eq.s32.totalorder %s92, 0
      %s95 = sadd.s32 %s94, 1
      %s96 = scalar_select %p93, %s94, %s95
      %p99 = pneg %p93
      %p100 = scmp.eq.s32.totalorder %s21, 1
      %p101 = por %p99, %p100
      %p102 = scmp.ne.s32.totalorder %s94, %s97
      %p103 = scmp.eq.s32.totalorder %s21, 0
      %p104 = por %p102, %p103
      %p105 = scmp.ne.s32.totalorder %s94, %s97
      %p106 = scmp.eq.s32.totalorder %s26, 1
      %p107 = por %p105, %p106
      %p108 = scmp.ne.s32.totalorder %s97, %s98
      %p109 = scmp.eq.s32.totalorder %s26, 0
      %p110 = por %p108, %p109
      %p111 = scmp.ne.s32.totalorder %s97, %s98
      %p112 = scmp.eq.s32.totalorder %s27, 1
      %p113 = por %p111, %p112
      %p115 = scmp.ne.s32.totalorder %s98, %s114
      %p116 = scmp.eq.s32.totalorder %s27, 0
      %p117 = por %p115, %p116
      %s118 = ssub.s32 %s28, %s40
      %s119 = ssub.s32 %s29, %s36
      %s120 = sor.u32 %s118, %s119
      %p121 = scmp.eq.s32.totalorder %s120, 0
      %s123 = sadd.s32 %s122, 1
      %s124 = scalar_select %p121, %s122, %s123
      %p127 = pneg %p121
      %p128 = scmp.eq.s32.totalorder %s21, 1
      %p129 = por %p127, %p128
      %p130 = scmp.ne.s32.totalorder %s122, %s125
      %p131 = scmp.eq.s32.totalorder %s21, 0
      %p132 = por %p130, %p131
      %p133 = scmp.ne.s32.totalorder %s122, %s125
      %p134 = scmp.eq.s32.totalorder %s26, 1
      %p135 = por %p133, %p134
      %p136 = scmp.ne.s32.totalorder %s125, %s126
      %p137 = scmp.eq.s32.totalorder %s26, 0
      %p138 = por %p136, %p137
      %p139 = scmp.ne.s32.totalorder %s125, %s126
      %p140 = scmp.eq.s32.totalorder %s27, 1
      %p141 = por %p139, %p140
      %p143 = scmp.ne.s32.totalorder %s126, %s142
      %p144 = scmp.eq.s32.totalorder %s27, 0
      %p145 = por %p143, %p144
      %s146 = ssub.s32 %s28, %s40
      %s147 = ssub.s32 %s29, %s36
      %s148 = sor.u32 %s146, %s147
      %p149 = scmp.eq.s32.totalorder %s148, 0
      %s151 = sadd.s32 %s150, 1
      %s152 = scalar_select %p149, %s150, %s151
      %p155 = pneg %p149
      %p156 = scmp.eq.s32.totalorder %s21, 1
      %p157 = por %p155, %p156
      %p158 = scmp.ne.s32.totalorder %s150, %s153
      %p159 = scmp.eq.s32.totalorder %s21, 0
      %p160 = por %p158, %p159
      %p161 = scmp.ne.s32.totalorder %s150, %s153
      %p162 = scmp.eq.s32.totalorder %s26, 1
      %p163 = por %p161, %p162
      %p164 = scmp.ne.s32.totalorder %s153, %s154
      %p165 = scmp.eq.s32.totalorder %s26, 0
      %p166 = por %p164, %p165
      %p167 = scmp.ne.s32.totalorder %s153, %s154
      %p168 = scmp.eq.s32.totalorder %s27, 1
      %p169 = por %p167, %p168
      %p171 = scmp.ne.s32.totalorder %s154, %s170
      %p172 = scmp.eq.s32.totalorder %s27, 0
      %p173 = por %p171, %p172
      %p174 = scmp.le.s32.totalorder 1, %s21
      %p175 = scmp.lt.s32.totalorder %s21, 3
      %p176 = pnand %p174, %p175
      %p177 = pneg %p176
      // Predicated region
      $region9: #{tpu_custom_call.1} parent=5 // pred_check
        _
      $region10: #{tpu_custom_call.1} parent=5 // pred_check_branch
        %179 = sbr.rel (%p176) target = $region12
      $region11: #{tpu_custom_call.1} parent=5 // pred_region
        %s180 = ssub.s32 %s21, 1
        // Predicated region
        $region13: #{tpu_custom_call.1} parent=11 // pred_check
          %p181 = pneg %p82
        $region14: #{tpu_custom_call.1} parent=11 // pred_check_branch
          %183 = sbr.rel (%p181) target = $region16
        $region15: #{tpu_custom_call.1} parent=11 // pred_region
          %s185 = ssub.s32 256, 256
          %186 = vsyncadd [#allocation6], %s185
          %s187 = sshll.u32 [#allocation5], 4
          %s188 = int_to_ptr.vmem [resolvable:$true] %s187
          %193 = dma.hbm_to_vmem [thread:$0]  %s1, 256, %s188, [#allocation6], 64, 64, 4
        $region16: #{tpu_custom_call.1} parent=11 // pred_fallthru
          _
      $region12: #{tpu_custom_call.1} parent=5 // pred_fallthru
        _
      %p194 = scmp.lt.s32.totalorder %s21, 2
      // Predicated region
      $region17: #{tpu_custom_call.1} parent=5 // pred_check
        %p195 = pneg %p194
      $region18: #{tpu_custom_call.1} parent=5 // pred_check_branch
        %197 = sbr.rel (%p195) target = $region20
      $region19: #{tpu_custom_call.1} parent=5 // pred_region
        // Predicated region
        $region21: #{tpu_custom_call.1} parent=19 // pred_check
          %p198 = pneg %p55
        $region22: #{tpu_custom_call.1} parent=19 // pred_check_branch
          %200 = sbr.rel (%p198) target = $region24
        $region23: #{tpu_custom_call.1} parent=19 // pred_region
          %s201 = sand.u32 %s45, 1
          %s202 = scalar_lea.sflag [#allocation3], %s201
          %s203 = sand.u32 %s45, 1
          %s204 = smul.addr %s203, 4
          %s205 = scalar_lea.vmem [#allocation2], %s204
          %s207 = ssub.s32 64, 64
          %208 = vsyncadd %s202, %s207
          %s209 = sadd.s32 %s29, %s28
          %s210 = smul.addr %s209, 64
          %s211 = scalar_lea.hbm %s0, %s210
          %s213 = sshll.u32 %s205, 4
          %s214 = int_to_ptr.vmem [resolvable:$true] %s213
          %216 = dma.hbm_to_vmem [thread:$0]  %s211, 64, %s214, %s202
        $region24: #{tpu_custom_call.1} parent=19 // pred_fallthru
          _
      $region20: #{tpu_custom_call.1} parent=5 // pred_fallthru
        _
      %p217 = scmp.le.s32.totalorder 1, %s21
      %p218 = scmp.lt.s32.totalorder %s21, 3
      %p219 = pnand %p217, %p218
      %p220 = pneg %p219
      // Predicated region
      $region25: #{tpu_custom_call.1} parent=5 // pred_check
        _
      $region26: #{tpu_custom_call.1} parent=5 // pred_check_branch
        %222 = sbr.rel (%p219) target = $region28
      $region27: #{tpu_custom_call.1} parent=5 // pred_region
        %s223 = ssub.s32 %s21, 1
        %s224 = sand.u32 %s48, 1
        %s225 = scalar_lea.sflag [#allocation3], %s224
        %s226 = sand.u32 %s48, 1
        %s227 = smul.addr %s226, 4
        %s228 = scalar_lea.vmem [#allocation2], %s227
        // Predicated region
        $region29: #{tpu_custom_call.1} parent=27 // pred_check
          %p229 = pneg %p61
        $region30: #{tpu_custom_call.1} parent=27 // pred_check_branch
          %231 = sbr.rel (%p229) target = $region32
        $region31: #{tpu_custom_call.1} parent=27 // pred_region
          %232 = dma.done %s225, 64
        $region32: #{tpu_custom_call.1} parent=27 // pred_fallthru
          _
        // Predicated region
        $region33: #{tpu_custom_call.1} parent=27 // pred_check
          %p233 = pneg %p82
        $region34: #{tpu_custom_call.1} parent=27 // pred_check_branch
          %235 = sbr.rel (%p233) target = $region36
        $region35: #{tpu_custom_call.1} parent=27 // pred_region
          %236 = dma.done [#allocation6], 256
        $region36: #{tpu_custom_call.1} parent=27 // pred_fallthru
          _
        %s237 = sand.u32 %s48, 1
        %s238 = scalar_lea.sflag [#allocation3], %s237
        %s239 = sand.u32 %s48, 1
        %s240 = smul.addr %s239, 4
        %s241 = scalar_lea.vmem [#allocation2], %s240
        %p242 = pneg %p61
        %p243 = pneg %p58
        %p244 = pneg %p82
        %p245 = pneg %p79
        %p246 = pneg %p110
        %p247 = pneg %p107
        %s248 = sand.u32 %s97, 1
        %s249 = scalar_lea.sflag [#allocation4], %s248
        %s250 = sand.u32 %s97, 1
        %s251 = smul.addr %s250, 16
        %s252 = scalar_lea.vmem [#allocation7], %s251
        %p253 = pneg %p138
        %p254 = pneg %p135
        %s255 = sand.u32 %s26, 1
        %s256 = scalar_lea.sflag [#allocation9], %s255
        %s257 = sand.u32 %s125, 1
        %s258 = smul.addr %s257, 16
        %s259 = scalar_lea.vmem [#allocation8], %s258
        %p260 = pneg %p166
        %p261 = pneg %p163
        %s262 = sand.u32 %s26, 1
        %s263 = scalar_lea.sflag [#allocation9], %s262
        %s264 = sand.u32 %s153, 1
        %s265 = smul.addr %s264, 16
        %s266 = scalar_lea.vmem [#allocation10], %s265
        %v268 = vld [vmem:[%s228] sm:$0xf]
        %v269 = vld [vmem:[#allocation5] sm:$0xf]
        %v270 = vld [vmem:[#allocation5 + $0x4] sm:$0xf]
        %v271 = vld [vmem:[#allocation5 + $0x8] sm:$0xf]
        %v272 = vld [vmem:[#allocation5 + $0xc] sm:$0xf]
        %v277 = vunpack.c.l.b16 %v269
        %v278 = vunpack.c.l.b16 %v270
        %v279 = vunpack.c.l.b16 %v271
        %v280 = vunpack.c.l.b16 %v272
        %v281 = vpack.c.b16 %v278, %v277
        %v282 = vpack.c.b16 %v280, %v279
        %vm285 = vcmask 261120
        %v287 = vsel %vm285, %v268, 0
        %289 = vmatprep.subr.bf16.mxu0 0
        %290 = vmatpush1.bf16.msra.mxu0 0
        %291 = vmatprep.subr.bf16.mxu0 0
        %292 = vmatpush1.bf16.msra.mxu0 0
        %293 = vmatprep.subr.bf16.mxu0 0
        %294 = vmatpush1.bf16.msra.mxu0 0
        %295 = vmatprep.subr.bf16.mxu0 0
        %296 = vmatpush1.bf16.msra.mxu0 0
        %297 = vmatprep.subr.bf16.mxu0 0
        %298 = vmatpush1.bf16.msra.mxu0 0
        %299 = vmatprep.subr.bf16.mxu0 0
        %300 = vmatpush1.bf16.msra.mxu0 0
        %301 = vmatprep.subr.bf16.mxu0 0
        %302 = vmatpush1.bf16.msra.mxu0 %v282
        %303 = vmatprep.subr.bf16.mxu0 0
        %304 = vmatpush1.bf16.msra.mxu0 %v281
        %305 = vmatprep.subr.bf16.mxu0 0
        %306 = vmatpush2.bf16.msra.mxu0 0
        %307 = vmatprep.subr.bf16.mxu0 0
        %308 = vmatpush2.bf16.msra.mxu0 0
        %309 = vmatprep.subr.bf16.mxu0 0
        %310 = vmatpush2.bf16.msra.mxu0 0
        %311 = vmatprep.subr.bf16.mxu0 0
        %312 = vmatpush2.bf16.msra.mxu0 0
        %313 = vmatprep.subr.bf16.mxu0 0
        %314 = vmatpush2.bf16.msra.mxu0 0
        %315 = vmatprep.subr.bf16.mxu0 0
        %316 = vmatpush2.bf16.msra.mxu0 0
        %317 = vmatprep.subr.bf16.mxu0 0
        %318 = vmatpush2.bf16.msra.mxu0 0
        %319 = vmatprep.subr.bf16.mxu0 0
        %320 = vmatpush2.bf16.msra.mxu0 0
        %321 = vmatprep.mubr.bf16.mxu0 0
        %322 = vmatmul.mubr.bf16.gmra.mxu0 %v287
        %v323 = vpop.f32.mrf.mxu0
        %v324 = vadd.f32 0.0, %v323
        %v325 = vpop.f32.mrf.mxu0
        %v326 = vpop.f32.mrf.mxu0
        %v327 = vpop.f32.mrf.mxu0
        %328 = vdwg.mxu0
        %v329 = vpack.c.bf16 %v324, %v324
        %331 = vrot.lane.b32.xlu0 %v329, 120
        %v332 = vpop.permute.xlu0 %331
        %333 = vrot.lane.b32.xlu0 %v329, 112
        %v334 = vpop.permute.xlu0 %333
        %335 = vrot.lane.b32.xlu0 %v329, 104
        %v336 = vpop.permute.xlu0 %335
        %v338 = vunpack.c.l.s4 1983009808
        %v339 = vunpack.c.0.s8 %v338
        %v340 = vlaneseq
        %v341 = vshrl.u32 %v340, 7
        %v342 = vsub.s32 %v339, %v341
        %v343 = vrot.slane %v329, %v342
        %v346 = vunpack.c.l.s4 1983009808
        %v347 = vunpack.c.0.s8 %v346
        %v348 = vlaneseq
        %v349 = vshrl.u32 %v348, 7
        %v350 = vsub.s32 %v347, %v349
        %v351 = vrot.slane %v334, %v350
        %v352 = vcombine.low %v343, %v351
        %v353 = vcombine.high %v343, %v351
        %v355 = vunpack.c.l.s4 1934713408
        %v356 = vunpack.c.0.s8 %v355
        %v357 = vlaneseq
        %v358 = vshrl.u32 %v357, 7
        %v359 = vsub.s32 %v356, %v358
        %v360 = vrot.slane %v352, %v359
        %v362 = vunpack.c.l.s4 1934713408
        %v363 = vunpack.c.0.s8 %v362
        %v364 = vlaneseq
        %v365 = vshrl.u32 %v364, 7
        %v366 = vsub.s32 %v363, %v365
        %v367 = vrot.slane %v353, %v366
        %v368 = vcombine.high %v360, 0
        %v369 = vcombine.high %v367, 0
        %v372 = vunpack.c.l.s4 1983009808
        %v373 = vunpack.c.0.s8 %v372
        %v374 = vlaneseq
        %v375 = vshrl.u32 %v374, 7
        %v376 = vsub.s32 %v373, %v375
        %v377 = vrot.slane %v332, %v376
        %v380 = vunpack.c.l.s4 1983009808
        %v381 = vunpack.c.0.s8 %v380
        %v382 = vlaneseq
        %v383 = vshrl.u32 %v382, 7
        %v384 = vsub.s32 %v381, %v383
        %v385 = vrot.slane %v336, %v384
        %v386 = vcombine.low %v377, %v385
        %v387 = vcombine.high %v377, %v385
        %v389 = vunpack.c.l.s4 1934713408
        %v390 = vunpack.c.0.s8 %v389
        %v391 = vlaneseq
        %v392 = vshrl.u32 %v391, 7
        %v393 = vsub.s32 %v390, %v392
        %v394 = vrot.slane %v386, %v393
        %v396 = vunpack.c.l.s4 1934713408
        %v397 = vunpack.c.0.s8 %v396
        %v398 = vlaneseq
        %v399 = vshrl.u32 %v398, 7
        %v400 = vsub.s32 %v397, %v399
        %v401 = vrot.slane %v387, %v400
        %v402 = vcombine.high %v394, 0
        %v403 = vcombine.high %v401, 0
        %v406 = vpack.i.b16 %v394, %v360
        %v408 = vshrl.u32 %v360, 16
        %v409 = vshrl.u32 %v394, 16
        %v410 = vpack.i.b16 %v409, %v408
        %v414 = vpack.i.b16 %v402, %v368
        %v416 = vshrl.u32 %v368, 16
        %v417 = vshrl.u32 %v402, 16
        %v418 = vpack.i.b16 %v417, %v416
        %v422 = vpack.i.b16 %v401, %v367
        %v424 = vshrl.u32 %v367, 16
        %v425 = vshrl.u32 %v401, 16
        %v426 = vpack.i.b16 %v425, %v424
        %v430 = vpack.i.b16 %v403, %v369
        %v432 = vshrl.u32 %v369, 16
        %v433 = vshrl.u32 %v403, 16
        %v434 = vpack.i.b16 %v433, %v432
        %v436 = vcombine.low %v406, %v422
        %v438 = vunpack.c.l.s4 1983009808
        %v439 = vunpack.c.0.s8 %v438
        %v440 = vlaneseq
        %v441 = vshrl.u32 %v440, 7
        %v442 = vsub.s32 %v439, %v441
        %v443 = vrot.slane %v436, %v442
        %v444 = vcombine.low %v414, %v430
        %v446 = vunpack.c.l.s4 1983009808
        %v447 = vunpack.c.0.s8 %v446
        %v448 = vlaneseq
        %v449 = vshrl.u32 %v448, 7
        %v450 = vsub.s32 %v447, %v449
        %v451 = vrot.slane %v444, %v450
        %v452 = vcombine.low %v443, %v451
        %v454 = vunpack.c.l.s4 1934713408
        %v455 = vunpack.c.0.s8 %v454
        %v456 = vlaneseq
        %v457 = vshrl.u32 %v456, 7
        %v458 = vsub.s32 %v455, %v457
        %v459 = vrot.slane %v452, %v458
        %v460 = vcombine.high %v459, 0
        %v461 = vcombine.low %v410, %v426
        %v463 = vunpack.c.l.s4 1983009808
        %v464 = vunpack.c.0.s8 %v463
        %v465 = vlaneseq
        %v466 = vshrl.u32 %v465, 7
        %v467 = vsub.s32 %v464, %v466
        %v468 = vrot.slane %v461, %v467
        %v469 = vcombine.low %v418, %v434
        %v471 = vunpack.c.l.s4 1983009808
        %v472 = vunpack.c.0.s8 %v471
        %v473 = vlaneseq
        %v474 = vshrl.u32 %v473, 7
        %v475 = vsub.s32 %v472, %v474
        %v476 = vrot.slane %v469, %v475
        %v477 = vcombine.low %v468, %v476
        %v479 = vunpack.c.l.s4 1934713408
        %v480 = vunpack.c.0.s8 %v479
        %v481 = vlaneseq
        %v482 = vshrl.u32 %v481, 7
        %v483 = vsub.s32 %v480, %v482
        %v484 = vrot.slane %v477, %v483
        %v485 = vcombine.high %v484, 0
        %v488 = vpack.i.b16 %v484, %v459
        %v490 = vshrl.u32 %v459, 16
        %v491 = vshrl.u32 %v484, 16
        %v492 = vpack.i.b16 %v491, %v490
        %v496 = vpack.i.b16 %v485, %v460
        %v498 = vshrl.u32 %v460, 16
        %v499 = vshrl.u32 %v485, 16
        %v500 = vpack.i.b16 %v499, %v498
        %vm502 = vcmask 60416
        %503 = vst.msk [vmem:[%s252] sm:$0xf] %vm502, %v488
        %504 = vst.msk [vmem:[%s252 + $0x4] sm:$0xf] %vm502, %v492
        %505 = vst.msk [vmem:[%s252 + $0x8] sm:$0xf] %vm502, %v496
        %506 = vst.msk [vmem:[%s252 + $0xc] sm:$0xf] %vm502, %v500
        %507 = vrot.lane.b32.xlu0 %v329, 96
        %v508 = vpop.permute.xlu0 %507
        %509 = vrot.lane.b32.xlu0 %v332, 96
        %v510 = vpop.permute.xlu0 %509
        %511 = vrot.lane.b32.xlu0 %v334, 96
        %v512 = vpop.permute.xlu0 %511
        %513 = vrot.lane.b32.xlu0 %v336, 96
        %v514 = vpop.permute.xlu0 %513
        %v517 = vunpack.c.l.s4 1983009808
        %v518 = vunpack.c.0.s8 %v517
        %v519 = vlaneseq
        %v520 = vshrl.u32 %v519, 7
        %v521 = vsub.s32 %v518, %v520
        %v522 = vrot.slane %v508, %v521
        %v525 = vunpack.c.l.s4 1983009808
        %v526 = vunpack.c.0.s8 %v525
        %v527 = vlaneseq
        %v528 = vshrl.u32 %v527, 7
        %v529 = vsub.s32 %v526, %v528
        %v530 = vrot.slane %v512, %v529
        %v531 = vcombine.low %v522, %v530
        %v532 = vcombine.high %v522, %v530
        %v534 = vunpack.c.l.s4 1934713408
        %v535 = vunpack.c.0.s8 %v534
        %v536 = vlaneseq
        %v537 = vshrl.u32 %v536, 7
        %v538 = vsub.s32 %v535, %v537
        %v539 = vrot.slane %v531, %v538
        %v541 = vunpack.c.l.s4 1934713408
        %v542 = vunpack.c.0.s8 %v541
        %v543 = vlaneseq
        %v544 = vshrl.u32 %v543, 7
        %v545 = vsub.s32 %v542, %v544
        %v546 = vrot.slane %v532, %v545
        %v547 = vcombine.high %v539, 0
        %v548 = vcombine.high %v546, 0
        %v551 = vunpack.c.l.s4 1983009808
        %v552 = vunpack.c.0.s8 %v551
        %v553 = vlaneseq
        %v554 = vshrl.u32 %v553, 7
        %v555 = vsub.s32 %v552, %v554
        %v556 = vrot.slane %v510, %v555
        %v559 = vunpack.c.l.s4 1983009808
        %v560 = vunpack.c.0.s8 %v559
        %v561 = vlaneseq
        %v562 = vshrl.u32 %v561, 7
        %v563 = vsub.s32 %v560, %v562
        %v564 = vrot.slane %v514, %v563
        %v565 = vcombine.low %v556, %v564
        %v566 = vcombine.high %v556, %v564
        %v568 = vunpack.c.l.s4 1934713408
        %v569 = vunpack.c.0.s8 %v568
        %v570 = vlaneseq
        %v571 = vshrl.u32 %v570, 7
        %v572 = vsub.s32 %v569, %v571
        %v573 = vrot.slane %v565, %v572
        %v575 = vunpack.c.l.s4 1934713408
        %v576 = vunpack.c.0.s8 %v575
        %v577 = vlaneseq
        %v578 = vshrl.u32 %v577, 7
        %v579 = vsub.s32 %v576, %v578
        %v580 = vrot.slane %v566, %v579
        %v581 = vcombine.high %v573, 0
        %v582 = vcombine.high %v580, 0
        %v585 = vpack.i.b16 %v573, %v539
        %v587 = vshrl.u32 %v539, 16
        %v588 = vshrl.u32 %v573, 16
        %v589 = vpack.i.b16 %v588, %v587
        %v593 = vpack.i.b16 %v581, %v547
        %v595 = vshrl.u32 %v547, 16
        %v596 = vshrl.u32 %v581, 16
        %v597 = vpack.i.b16 %v596, %v595
        %v601 = vpack.i.b16 %v580, %v546
        %v603 = vshrl.u32 %v546, 16
        %v604 = vshrl.u32 %v580, 16
        %v605 = vpack.i.b16 %v604, %v603
        %v609 = vpack.i.b16 %v582, %v548
        %v611 = vshrl.u32 %v548, 16
        %v612 = vshrl.u32 %v582, 16
        %v613 = vpack.i.b16 %v612, %v611
        %v615 = vcombine.low %v585, %v601
        %v617 = vunpack.c.l.s4 1983009808
        %v618 = vunpack.c.0.s8 %v617
        %v619 = vlaneseq
        %v620 = vshrl.u32 %v619, 7
        %v621 = vsub.s32 %v618, %v620
        %v622 = vrot.slane %v615, %v621
        %v623 = vcombine.low %v593, %v609
        %v625 = vunpack.c.l.s4 1983009808
        %v626 = vunpack.c.0.s8 %v625
        %v627 = vlaneseq
        %v628 = vshrl.u32 %v627, 7
        %v629 = vsub.s32 %v626, %v628
        %v630 = vrot.slane %v623, %v629
        %v631 = vcombine.low %v622, %v630
        %v633 = vunpack.c.l.s4 1934713408
        %v634 = vunpack.c.0.s8 %v633
        %v635 = vlaneseq
        %v636 = vshrl.u32 %v635, 7
        %v637 = vsub.s32 %v634, %v636
        %v638 = vrot.slane %v631, %v637
        %v639 = vcombine.high %v638, 0
        %v640 = vcombine.low %v589, %v605
        %v642 = vunpack.c.l.s4 1983009808
        %v643 = vunpack.c.0.s8 %v642
        %v644 = vlaneseq
        %v645 = vshrl.u32 %v644, 7
        %v646 = vsub.s32 %v643, %v645
        %v647 = vrot.slane %v640, %v646
        %v648 = vcombine.low %v597, %v613
        %v650 = vunpack.c.l.s4 1983009808
        %v651 = vunpack.c.0.s8 %v650
        %v652 = vlaneseq
        %v653 = vshrl.u32 %v652, 7
        %v654 = vsub.s32 %v651, %v653
        %v655 = vrot.slane %v648, %v654
        %v656 = vcombine.low %v647, %v655
        %v658 = vunpack.c.l.s4 1934713408
        %v659 = vunpack.c.0.s8 %v658
        %v660 = vlaneseq
        %v661 = vshrl.u32 %v660, 7
        %v662 = vsub.s32 %v659, %v661
        %v663 = vrot.slane %v656, %v662
        %v664 = vcombine.high %v663, 0
        %v667 = vpack.i.b16 %v663, %v638
        %v669 = vshrl.u32 %v638, 16
        %v670 = vshrl.u32 %v663, 16
        %v671 = vpack.i.b16 %v670, %v669
        %v675 = vpack.i.b16 %v664, %v639
        %v677 = vshrl.u32 %v639, 16
        %v678 = vshrl.u32 %v664, 16
        %v679 = vpack.i.b16 %v678, %v677
        %681 = vst.msk [vmem:[%s259] sm:$0xf] %vm502, %v667
        %682 = vst.msk [vmem:[%s259 + $0x4] sm:$0xf] %vm502, %v671
        %683 = vst.msk [vmem:[%s259 + $0x8] sm:$0xf] %vm502, %v675
        %684 = vst.msk [vmem:[%s259 + $0xc] sm:$0xf] %vm502, %v679
        %685 = vrot.lane.b32.xlu0 %v329, 64
        %v686 = vpop.permute.xlu0 %685
        %687 = vrot.lane.b32.xlu0 %v332, 64
        %v688 = vpop.permute.xlu0 %687
        %689 = vrot.lane.b32.xlu0 %v334, 64
        %v690 = vpop.permute.xlu0 %689
        %691 = vrot.lane.b32.xlu0 %v336, 64
        %v692 = vpop.permute.xlu0 %691
        %v695 = vunpack.c.l.s4 1983009808
        %v696 = vunpack.c.0.s8 %v695
        %v697 = vlaneseq
        %v698 = vshrl.u32 %v697, 7
        %v699 = vsub.s32 %v696, %v698
        %v700 = vrot.slane %v686, %v699
        %v703 = vunpack.c.l.s4 1983009808
        %v704 = vunpack.c.0.s8 %v703
        %v705 = vlaneseq
        %v706 = vshrl.u32 %v705, 7
        %v707 = vsub.s32 %v704, %v706
        %v708 = vrot.slane %v690, %v707
        %v709 = vcombine.low %v700, %v708
        %v710 = vcombine.high %v700, %v708
        %v712 = vunpack.c.l.s4 1934713408
        %v713 = vunpack.c.0.s8 %v712
        %v714 = vlaneseq
        %v715 = vshrl.u32 %v714, 7
        %v716 = vsub.s32 %v713, %v715
        %v717 = vrot.slane %v709, %v716
        %v719 = vunpack.c.l.s4 1934713408
        %v720 = vunpack.c.0.s8 %v719
        %v721 = vlaneseq
        %v722 = vshrl.u32 %v721, 7
        %v723 = vsub.s32 %v720, %v722
        %v724 = vrot.slane %v710, %v723
        %v725 = vcombine.high %v717, 0
        %v726 = vcombine.high %v724, 0
        %v729 = vunpack.c.l.s4 1983009808
        %v730 = vunpack.c.0.s8 %v729
        %v731 = vlaneseq
        %v732 = vshrl.u32 %v731, 7
        %v733 = vsub.s32 %v730, %v732
        %v734 = vrot.slane %v688, %v733
        %v737 = vunpack.c.l.s4 1983009808
        %v738 = vunpack.c.0.s8 %v737
        %v739 = vlaneseq
        %v740 = vshrl.u32 %v739, 7
        %v741 = vsub.s32 %v738, %v740
        %v742 = vrot.slane %v692, %v741
        %v743 = vcombine.low %v734, %v742
        %v744 = vcombine.high %v734, %v742
        %v746 = vunpack.c.l.s4 1934713408
        %v747 = vunpack.c.0.s8 %v746
        %v748 = vlaneseq
        %v749 = vshrl.u32 %v748, 7
        %v750 = vsub.s32 %v747, %v749
        %v751 = vrot.slane %v743, %v750
        %v753 = vunpack.c.l.s4 1934713408
        %v754 = vunpack.c.0.s8 %v753
        %v755 = vlaneseq
        %v756 = vshrl.u32 %v755, 7
        %v757 = vsub.s32 %v754, %v756
        %v758 = vrot.slane %v744, %v757
        %v759 = vcombine.high %v751, 0
        %v760 = vcombine.high %v758, 0
        %v763 = vpack.i.b16 %v751, %v717
        %v765 = vshrl.u32 %v717, 16
        %v766 = vshrl.u32 %v751, 16
        %v767 = vpack.i.b16 %v766, %v765
        %v771 = vpack.i.b16 %v759, %v725
        %v773 = vshrl.u32 %v725, 16
        %v774 = vshrl.u32 %v759, 16
        %v775 = vpack.i.b16 %v774, %v773
        %v779 = vpack.i.b16 %v758, %v724
        %v781 = vshrl.u32 %v724, 16
        %v782 = vshrl.u32 %v758, 16
        %v783 = vpack.i.b16 %v782, %v781
        %v787 = vpack.i.b16 %v760, %v726
        %v789 = vshrl.u32 %v726, 16
        %v790 = vshrl.u32 %v760, 16
        %v791 = vpack.i.b16 %v790, %v789
        %v793 = vcombine.low %v763, %v779
        %v795 = vunpack.c.l.s4 1983009808
        %v796 = vunpack.c.0.s8 %v795
        %v797 = vlaneseq
        %v798 = vshrl.u32 %v797, 7
        %v799 = vsub.s32 %v796, %v798
        %v800 = vrot.slane %v793, %v799
        %v801 = vcombine.low %v771, %v787
        %v803 = vunpack.c.l.s4 1983009808
        %v804 = vunpack.c.0.s8 %v803
        %v805 = vlaneseq
        %v806 = vshrl.u32 %v805, 7
        %v807 = vsub.s32 %v804, %v806
        %v808 = vrot.slane %v801, %v807
        %v809 = vcombine.low %v800, %v808
        %v811 = vunpack.c.l.s4 1934713408
        %v812 = vunpack.c.0.s8 %v811
        %v813 = vlaneseq
        %v814 = vshrl.u32 %v813, 7
        %v815 = vsub.s32 %v812, %v814
        %v816 = vrot.slane %v809, %v815
        %v817 = vcombine.high %v816, 0
        %v818 = vcombine.low %v767, %v783
        %v820 = vunpack.c.l.s4 1983009808
        %v821 = vunpack.c.0.s8 %v820
        %v822 = vlaneseq
        %v823 = vshrl.u32 %v822, 7
        %v824 = vsub.s32 %v821, %v823
        %v825 = vrot.slane %v818, %v824
        %v826 = vcombine.low %v775, %v791
        %v828 = vunpack.c.l.s4 1983009808
        %v829 = vunpack.c.0.s8 %v828
        %v830 = vlaneseq
        %v831 = vshrl.u32 %v830, 7
        %v832 = vsub.s32 %v829, %v831
        %v833 = vrot.slane %v826, %v832
        %v834 = vcombine.low %v825, %v833
        %v836 = vunpack.c.l.s4 1934713408
        %v837 = vunpack.c.0.s8 %v836
        %v838 = vlaneseq
        %v839 = vshrl.u32 %v838, 7
        %v840 = vsub.s32 %v837, %v839
        %v841 = vrot.slane %v834, %v840
        %v842 = vcombine.high %v841, 0
        %v845 = vpack.i.b16 %v841, %v816
        %v847 = vshrl.u32 %v816, 16
        %v848 = vshrl.u32 %v841, 16
        %v849 = vpack.i.b16 %v848, %v847
        %v853 = vpack.i.b16 %v842, %v817
        %v855 = vshrl.u32 %v817, 16
        %v856 = vshrl.u32 %v842, 16
        %v857 = vpack.i.b16 %v856, %v855
        %859 = vst.msk [vmem:[%s266] sm:$0xf] %vm502, %v845
        %860 = vst.msk [vmem:[%s266 + $0x4] sm:$0xf] %vm502, %v849
        %861 = vst.msk [vmem:[%s266 + $0x8] sm:$0xf] %vm502, %v853
        %862 = vst.msk [vmem:[%s266 + $0xc] sm:$0xf] %vm502, %v857
        %s863 = sand.u32 %s97, 1
        %s864 = scalar_lea.sflag [#allocation4], %s863
        %s865 = sand.u32 %s97, 1
        %s866 = smul.addr %s865, 16
        %s867 = scalar_lea.vmem [#allocation7], %s866
        %s868 = sand.u32 %s26, 1
        %s869 = scalar_lea.sflag [#allocation9], %s868
        %s870 = sand.u32 %s125, 1
        %s871 = smul.addr %s870, 16
        %s872 = scalar_lea.vmem [#allocation8], %s871
        %s873 = sand.u32 %s26, 1
        %s874 = scalar_lea.sflag [#allocation9], %s873
        %s875 = sand.u32 %s153, 1
        %s876 = smul.addr %s875, 16
        %s877 = scalar_lea.vmem [#allocation10], %s876
        // Predicated region
        $region37: #{tpu_custom_call.1} parent=27 // pred_check
          %p878 = pneg %p107
        $region38: #{tpu_custom_call.1} parent=27 // pred_check_branch
          %880 = sbr.rel (%p878) target = $region40
        $region39: #{tpu_custom_call.1} parent=27 // pred_region
          %s882 = ssub.s32 256, 256
          %883 = vsyncadd %s864, %s882
          %s884 = smul.addr %s30, 4
          %s885 = sadd.s32 %s31, %s884
          %s886 = smul.addr %s885, 64
          %s887 = scalar_lea.hbm %s2, %s886
          %s888 = sshll.u32 %s867, 4
          %s889 = int_to_ptr.vmem [resolvable:$true] %s888
          %894 = dma.vmem_to_hbm [thread:$0]  %s889, 256, %s887, %s864, 64, 64, 4
        $region40: #{tpu_custom_call.1} parent=27 // pred_fallthru
          _
        // Predicated region
        $region41: #{tpu_custom_call.1} parent=27 // pred_check
          %p895 = pneg %p135
        $region42: #{tpu_custom_call.1} parent=27 // pred_check_branch
          %897 = sbr.rel (%p895) target = $region44
        $region43: #{tpu_custom_call.1} parent=27 // pred_region
          %s899 = ssub.s32 256, 256
          %900 = vsyncadd %s869, %s899
          %s901 = smul.addr %s30, 4
          %s902 = sadd.s32 %s31, %s901
          %s903 = smul.addr %s902, 64
          %s904 = scalar_lea.hbm %s3, %s903
          %s905 = sshll.u32 %s872, 4
          %s906 = int_to_ptr.vmem [resolvable:$true] %s905
          %911 = dma.vmem_to_hbm [thread:$0]  %s906, 256, %s904, %s869, 64, 64, 4
        $region44: #{tpu_custom_call.1} parent=27 // pred_fallthru
          _
        // Predicated region
        $region45: #{tpu_custom_call.1} parent=27 // pred_check
          %p912 = pneg %p163
        $region46: #{tpu_custom_call.1} parent=27 // pred_check_branch
          %914 = sbr.rel (%p912) target = $region48
        $region47: #{tpu_custom_call.1} parent=27 // pred_region
          %s916 = ssub.s32 256, 256
          %917 = vsyncadd %s874, %s916
          %s918 = smul.addr %s30, 4
          %s919 = sadd.s32 %s31, %s918
          %s920 = smul.addr %s919, 64
          %s921 = scalar_lea.hbm %s4, %s920
          %s922 = sshll.u32 %s877, 4
          %s923 = int_to_ptr.vmem [resolvable:$true] %s922
          %928 = dma.vmem_to_hbm [thread:$0]  %s923, 256, %s921, %s874, 64, 64, 4
        $region48: #{tpu_custom_call.1} parent=27 // pred_fallthru
          _
      $region28: #{tpu_custom_call.1} parent=5 // pred_fallthru
        _
      %p929 = scmp.le.s32.totalorder 2, %s21
      // Predicated region
      $region49: #{tpu_custom_call.1} parent=5 // pred_check
        %p930 = pneg %p929
      $region50: #{tpu_custom_call.1} parent=5 // pred_check_branch
        %932 = sbr.rel (%p930) target = $region52
      $region51: #{tpu_custom_call.1} parent=5 // pred_region
        %s933 = ssub.s32 %s21, 2
        // Predicated region
        $region53: #{tpu_custom_call.1} parent=51 // pred_check
          %p934 = pneg %p113
        $region54: #{tpu_custom_call.1} parent=51 // pred_check_branch
          %936 = sbr.rel (%p934) target = $region56
        $region55: #{tpu_custom_call.1} parent=51 // pred_region
          %s937 = sand.u32 %s98, 1
          %s938 = scalar_lea.sflag [#allocation4], %s937
          %s939 = sand.u32 %s98, 1
          %s940 = smul.addr %s939, 16
          %s941 = scalar_lea.vmem [#allocation7], %s940
          %942 = dma.done %s938, 256
        $region56: #{tpu_custom_call.1} parent=51 // pred_fallthru
          _
        // Predicated region
        $region57: #{tpu_custom_call.1} parent=51 // pred_check
          %p943 = pneg %p141
        $region58: #{tpu_custom_call.1} parent=51 // pred_check_branch
          %945 = sbr.rel (%p943) target = $region60
        $region59: #{tpu_custom_call.1} parent=51 // pred_region
          %s946 = sand.u32 %s27, 1
          %s947 = scalar_lea.sflag [#allocation9], %s946
          %s948 = sand.u32 %s126, 1
          %s949 = smul.addr %s948, 16
          %s950 = scalar_lea.vmem [#allocation8], %s949
          %951 = dma.done %s947, 256
        $region60: #{tpu_custom_call.1} parent=51 // pred_fallthru
          _
        // Predicated region
        $region61: #{tpu_custom_call.1} parent=51 // pred_check
          %p952 = pneg %p169
        $region62: #{tpu_custom_call.1} parent=51 // pred_check_branch
          %954 = sbr.rel (%p952) target = $region64
        $region63: #{tpu_custom_call.1} parent=51 // pred_region
          %s955 = sand.u32 %s27, 1
          %s956 = scalar_lea.sflag [#allocation9], %s955
          %s957 = sand.u32 %s154, 1
          %s958 = smul.addr %s957, 16
          %s959 = scalar_lea.vmem [#allocation10], %s958
          %960 = dma.done %s956, 256
        $region64: #{tpu_custom_call.1} parent=51 // pred_fallthru
          _
      $region52: #{tpu_custom_call.1} parent=5 // pred_fallthru
        _
    $region6: #{tpu_custom_call.1} parent=1 // loop_footer
      %s25 = sadd.s32 1, %s21
    $region7: #{tpu_custom_call.1} parent=1 // loop_footer_branch
      %20 = sbr.rel target = $region3
    $region8: #{tpu_custom_call.1} parent=1 // loop_exit
      _
    %961 = vsyncpa [#allocation3], 1
    %s962 = scalar_lea.sflag [#allocation3], 1
    %963 = vsyncpa %s962, 1
    %964 = vsyncpa [#allocation6], 1
    %965 = vsyncpa [#allocation4], 1
    %s966 = scalar_lea.sflag [#allocation4], 1
    %967 = vsyncpa %s966, 1
    %968 = vsyncpa [#allocation9], 1
    %s969 = scalar_lea.sflag [#allocation9], 1
    %970 = vsyncpa %s969, 1

</llo_original>
